<compile_context>
chip_gen: v5e
topology: v5e:2x2
jax: 0.10.0
libtpu: 0.0.40
codegen_flags: <defaults>
</compile_context>

<pallas_src>
import functools

import jax
import jax.numpy as jnp
from jax import lax
from jax.experimental import pallas as pl
from jax.experimental.pallas import tpu as pltpu


def _mce_kernel(x_ref, t_ref, out_ref, *, inv_tau, n_valid):
    """One sample tile (lane axis = samples): partial sum of log(1 - p_target)."""
    x = x_ref[...].astype(jnp.float32)               # (C, tn) logits tile
    t = t_ref[...]                                   # (1, tn) int32 targets
    tn = x.shape[1]

    z = x if inv_tau == 1.0 else x * inv_tau         # temperature (skipped for tau==1)
    mx = jnp.max(z, axis=0, keepdims=True)           # (1, tn) per-sample max (sublane reduce)
    s = jnp.exp(z - mx)                              # (C, tn) unnormalized probs
    denom = jnp.sum(s, axis=0, keepdims=True)        # (1, tn)

    # sum of non-target probabilities, directly (no one-hot multiply, no
    # cancellation-prone denom - s_t).  TODO(synk): no in-kernel validation
    # that target < C; out-of-range targets behave like "no class" (loss 0).
    classes = lax.broadcasted_iota(jnp.int32, s.shape, 0)      # class id per sublane
    excl = jnp.sum(jnp.where(classes != t, s, 0.0), axis=0, keepdims=True)

    loss = jnp.log(excl / denom)                     # (1, tn)

    # mask columns past the true sample count (last, partial tile); garbage in
    # those columns (including nan/inf) is confined per-column and zeroed here.
    col = pl.program_id(0) * tn + lax.broadcasted_iota(jnp.int32, loss.shape, 1)
    loss = jnp.where(col < n_valid, loss, 0.0)

    out_ref[...] = jnp.sum(loss).reshape(1, 1, 1)    # per-tile partial sum


def _round_up(x, m):
    return (x + m - 1) // m * m


def mean_clustering_error(logits, target, tau=1.0, tn=None):
    """Matches MeanClusteringError(num_classes=C, tau).forward(input, target).

    logits: (N, C) float array (f32 or bf16), class axis on dim 1.
    target: (N,)   int array of class indices in [0, C).
    """
    if logits.ndim != 2:
        raise ValueError("MeanClusteringError expects (N, C) logits")
    n, c = logits.shape
    itemsize = jnp.dtype(logits.dtype).itemsize

    # Lane-dense repack: one wrapper transpose so the kernel streams (C, tn)
    # tiles with the 128-lane axis fully populated by samples.
    xt = jnp.transpose(logits)                       # (C, N)
    tt = target.reshape(1, -1).astype(jnp.int32)     # (1, N)

    # --- generation-aware VMEM budget ---
    try:
        phys_vmem = int(pltpu.get_tpu_info().vmem_capacity_bytes)
    except Exception:                                # pragma: no cover - fallback
        phys_vmem = 64 * 1024 * 1024                 # v7x per-core capacity (smallest)
    vmem_limit = min(phys_vmem * 3 // 4, 96 * 1024 * 1024)

    # VMEM bytes per lane-column of tile width:
    #   x tile: sublane-padded C rows, input dtype, double-buffered
    #   t tile: (1, tn) int32 padded to 8 sublanes, double-buffered
    #   ~3 f32 temporaries of the (padded) x tile (upcast / exp / masked copy)
    sub = max(8, 32 // itemsize)                     # sublane packing for input dtype
    c_pad_in = _round_up(c, sub)
    c_pad_f32 = _round_up(c, 8)
    per_col = 2 * c_pad_in * itemsize + 2 * 8 * 4 + 3 * c_pad_f32 * 4

    if tn is None:
        budget = (vmem_limit * 3) // 4               # headroom inside the scoped limit
        tn = budget // per_col
        tn = min(tn, 256 * 1024)                     # MB-scale per-step HBM traffic is plenty
    tn = max(128, (tn // 128) * 128)                 # lane alignment

    n_lanes = _round_up(n, 128)
    tn = min(tn, n_lanes)                            # don't exceed the (lane-padded) problem
    if n_lanes >= 256:
        # keep >= 2 tiles so the "parallel" axis can use both v7x TensorCores
        tn = min(tn, _round_up(pl.cdiv(n_lanes, 2), 128))

    n_tiles = pl.cdiv(n, tn)
    kernel = functools.partial(_mce_kernel, inv_tau=1.0 / float(tau), n_valid=n)

    partials = pl.pallas_call(
        kernel,
        out_shape=jax.ShapeDtypeStruct((n_tiles, 1, 1), jnp.float32),
        grid=(n_tiles,),
        in_specs=[
            pl.BlockSpec((c, tn), lambda i: (0, i)),     # lane-dense logits tile
            pl.BlockSpec((1, tn), lambda i: (0, i)),     # lane-dense targets tile
        ],
        out_specs=pl.BlockSpec((1, 1, 1), lambda i: (i, 0, 0)),  # per-tile partial
        compiler_params=pltpu.CompilerParams(
            dimension_semantics=("parallel",),
            vmem_limit_bytes=int(vmem_limit)),
    )(xt, tt)

    # tiny cross-tile reduction + mean (a handful of scalars) in plain JAX
    return jnp.sum(partials) / jnp.float32(n)


def _mce_ref(logits, target, num_classes, tau=1.0):
    """Pure-JAX mirror of the PyTorch forward."""
    pred = jax.nn.softmax(logits.astype(jnp.float32) / tau, axis=1)
    q = jnp.eye(num_classes, dtype=jnp.float32)[target]
    p = jnp.sum((1.0 - q) * pred, axis=1) / jnp.sum(pred, axis=1)
    return jnp.mean(jnp.log(p))


if __name__ == "__main__":
    key = jax.random.PRNGKey(0)
    k1, k2, k3, k4 = jax.random.split(key, 4)

    # classification-style inputs: (batch, num_classes) logits + int targets
    N, C = 512, 4
    x = jax.random.normal(k1, (N, C), dtype=jnp.float32)
    target = jax.random.randint(k2, (N,), 0, C, dtype=jnp.int32)

    loss = mean_clustering_error(x, target, tau=1.0)
    jax.block_until_ready(loss)
    ref = _mce_ref(x, target, C, tau=1.0)
    assert jnp.allclose(loss, ref, rtol=1e-5, atol=1e-5), (loss, ref)

    # second case: ragged sample count (exercises the in-kernel edge mask),
    # bf16 logits, non-unit temperature
    N2, C2 = 203, 10
    x2 = jax.random.normal(k3, (N2, C2), dtype=jnp.bfloat16)
    t2 = jax.random.randint(k4, (N2,), 0, C2, dtype=jnp.int32)
    loss2 = mean_clustering_error(x2, t2, tau=2.0)
    jax.block_until_ready(loss2)
    ref2 = _mce_ref(x2, t2, C2, tau=2.0)
    assert jnp.allclose(loss2, ref2, rtol=1e-4, atol=1e-4), (loss2, ref2)

    print("KERNEL_OK")
</pallas_src>

<mosaic_0001>
module attributes {stable_mosaic.version = 11 : i64} {
  func.func @_mce_kernel(%arg0: i32, %arg1: memref<4x256xf32, #tpu.memory_space<vmem>>, %arg2: memref<1x256xi32, #tpu.memory_space<vmem>>, %arg3: memref<1x1x1xf32, #tpu.memory_space<vmem>>) attributes {dimension_semantics = [#tpu.dimension_semantics<parallel>], iteration_bounds = array<i64: 2>, scalar_prefetch = 0 : i64, scratch_operands = 0 : i64, tpu.core_type = #tpu.core_type<tc>, window_params = [{transform_indices = @transform_0, window_bounds = array<i64: 4, 256>}, {transform_indices = @transform_1, window_bounds = array<i64: 1, 256>}, {transform_indices = @transform_2, window_bounds = array<i64: 1, 1, 1>}]} {
    %c0 = arith.constant 0 : index
    %c0_0 = arith.constant 0 : index
    %0 = vector.load %arg1[%c0, %c0_0] : memref<4x256xf32, #tpu.memory_space<vmem>>, vector<4x256xf32>
    %c0_1 = arith.constant 0 : index
    %c0_2 = arith.constant 0 : index
    %1 = vector.load %arg2[%c0_1, %c0_2] : memref<1x256xi32, #tpu.memory_space<vmem>>, vector<1x256xi32>
    %cst = arith.constant dense<0xFF800000> : vector<256xf32>
    %2 = vector.multi_reduction <maximumf>, %0, %cst [0] : vector<4x256xf32> to vector<256xf32>
    %3 = vector.shape_cast %2 : vector<256xf32> to vector<1x256xf32>
    %4 = vector.broadcast %3 : vector<1x256xf32> to vector<4x256xf32>
    %5 = arith.subf %0, %4 : vector<4x256xf32>
    %6 = math.exp %5 : vector<4x256xf32>
    %cst_3 = arith.constant dense<0.000000e+00> : vector<256xf32>
    %7 = vector.multi_reduction <add>, %6, %cst_3 [0] : vector<4x256xf32> to vector<256xf32>
    %8 = vector.shape_cast %7 : vector<256xf32> to vector<1x256xf32>
    %9 = tpu.iota {dimensions = array<i32: 0>} : vector<4x256xi32>
    %10 = vector.broadcast %1 : vector<1x256xi32> to vector<4x256xi32>
    %11 = arith.cmpi ne, %9, %10 : vector<4x256xi32>
    %cst_4 = arith.constant 0.000000e+00 : f32
    %12 = vector.broadcast %cst_4 : f32 to vector<4x256xf32>
    %13 = arith.select %11, %6, %12 : vector<4x256xi1>, vector<4x256xf32>
    %cst_5 = arith.constant dense<0.000000e+00> : vector<256xf32>
    %14 = vector.multi_reduction <add>, %13, %cst_5 [0] : vector<4x256xf32> to vector<256xf32>
    %15 = vector.shape_cast %14 : vector<256xf32> to vector<1x256xf32>
    %16 = arith.divf %15, %8 : vector<1x256xf32>
    %17 = math.log %16 : vector<1x256xf32>
    %c256_i32 = arith.constant 256 : i32
    %18 = arith.muli %arg0, %c256_i32 : i32
    %19 = tpu.iota {dimensions = array<i32: 1>} : vector<1x256xi32>
    %20 = vector.broadcast %18 : i32 to vector<1x256xi32>
    %21 = arith.addi %20, %19 : vector<1x256xi32>
    %c512_i32 = arith.constant 512 : i32
    %22 = vector.broadcast %c512_i32 : i32 to vector<1x256xi32>
    %23 = arith.cmpi slt, %21, %22 : vector<1x256xi32>
    %cst_6 = arith.constant 0.000000e+00 : f32
    %24 = vector.broadcast %cst_6 : f32 to vector<1x256xf32>
    %25 = arith.select %23, %17, %24 : vector<1x256xi1>, vector<1x256xf32>
    %26 = vector.shape_cast %25 : vector<1x256xf32> to vector<1x1x256xf32>
    %cst_7 = arith.constant dense<0.000000e+00> : vector<1xf32>
    %27 = vector.multi_reduction <add>, %26, %cst_7 [1, 2] : vector<1x1x256xf32> to vector<1xf32>
    %28 = vector.shape_cast %27 : vector<1xf32> to vector<1x1x1xf32>
    %29 = vector.extract %28[0, 0, 0] : f32 from vector<1x1x1xf32>
    %30 = vector.broadcast %29 : f32 to vector<1x1x1xf32>
    %c0_8 = arith.constant 0 : index
    %c0_9 = arith.constant 0 : index
    %c0_10 = arith.constant 0 : index
    %31 = vector.load %arg3[%c0_8, %c0_9, %c0_10] : memref<1x1x1xf32, #tpu.memory_space<vmem>>, vector<1x1x1xf32>
    tpu.vector_store %arg3[%c0_8, %c0_9, %c0_10], %30 {strides = array<i32>} : memref<1x1x1xf32, #tpu.memory_space<vmem>>, vector<1x1x1xf32>,
    return
  }
  func.func @transform_0(%arg0: i32) -> (i32, i32) {
    %c0_i32 = arith.constant 0 : i32
    %c0_i32_0 = arith.constant 0 : i32
    return %c0_i32, %arg0 : i32, i32
  }
  func.func @transform_1(%arg0: i32) -> (i32, i32) {
    %c0_i32 = arith.constant 0 : i32
    %c0_i32_0 = arith.constant 0 : i32
    return %c0_i32, %arg0 : i32, i32
  }
  func.func @transform_2(%arg0: i32) -> (i32, i32, i32) {
    %c0_i32 = arith.constant 0 : i32
    %c0_i32_0 = arith.constant 0 : i32
    %c0_i32_1 = arith.constant 0 : i32
    return %arg0, %c0_i32, %c0_i32_0 : i32, i32, i32
  }
}

</mosaic_0001>

<llo_original>
// kernel: tpu_custom_call.1
$region0: #{tpu_custom_call.1}
  #allocation0 [shape = 'u32[]', space=smem, size = 0x4, offset = 0x4, fixed_abs, tag = 'smem constant byte address 0x4 - core index']
  #allocation1 [shape = 'u32[72,128]{1,0:T(1,128)}', space=vmem, size = 0x9000, scoped, tag = 'internal scratch']
  %s0 = inlined_call_operand.hbm [shape: f32[4,512], index: 0, kind: input, shape index: {}]
  %s1 = inlined_call_operand.hbm [shape: s32[1,512], index: 1, kind: input, shape index: {}]
  %s2 = inlined_call_operand.vmem [shape: f32[2,1,1], index: 2, kind: output, shape index: {}]
  %s3 = sld [smem:[#allocation0]]
  $region49: #{tpu_custom_call.1} parent=0
    _
  %s5 = ssub.s32 1, %s3
  %s6 = scalar_select 0, %s5, %s3
  $region1: #{tpu_custom_call.1} parent=0
    #allocation2 [shape = 'u8[8192]{0}', space=vmem, size = 0x2000, scoped, tag = 'input window, operand 0']
    #allocation3 [shape = 's32[2]{0}', space=sflag, size = 0x8, scoped, tag = 'scoped memory for tpu_custom_call.1']
    #allocation4 [shape = 'u8[2048]{0}', space=vmem, size = 0x800, scoped, tag = 'input window, operand 1']
    #allocation5 [shape = 's32[2]{0}', space=sflag, size = 0x8, scoped, tag = 'scoped memory for tpu_custom_call.1']
    %7 = vsyncpa [#allocation3], 0
    %s8 = scalar_lea.sflag [#allocation3], 1
    %9 = vsyncpa %s8, 0
    %10 = vsyncpa [#allocation5], 0
    %s11 = scalar_lea.sflag [#allocation5], 1
    %12 = vsyncpa %s11, 0
    loop: start=0, step=1, limit=4
    $region2: #{tpu_custom_call.1} parent=1 // loop_pre_header
      _
    $region3: #{tpu_custom_call.1} parent=1 // loop_header
      %s14 = sphi 0, %s18
      %p15 = scmp.ge.s32.totalorder %s14, 4
      %s24 = sphi 0, %s26
      %s27 = sphi 0, %s24
      %s28 = sphi 0, %s27
      %s44 = sphi 0, %s28
      %s50 = sphi 0, %s52
      %s53 = sphi 0, %s50
      %s54 = sphi 0, %s53
      %s70 = sphi 0, %s54
      %s76 = sphi 0, %s78
      %s79 = sphi 0, %s76
      %s80 = sphi 0, %s79
      %s96 = sphi 0, %s80
    $region4: #{tpu_custom_call.1} parent=1 // loop_header_branch
      %17 = sbr.rel (%p15) target = $region8
    $region5: #{tpu_custom_call.1} parent=1 // loop_body
      %s19 = ssub.s32 %s14, 1
      %s20 = ssub.s32 %s14, 2
      %s21 = sadd.s32 %s14, 1
      %s22 = ssub.s32 %s14, %s21
      %p23 = scmp.eq.s32.totalorder %s22, 0
      %s25 = sadd.s32 %s24, 1
      %s26 = scalar_select %p23, %s24, %s25
      %p29 = pneg %p23
      %p30 = scmp.eq.s32.totalorder %s14, 1
      %p31 = por %p29, %p30
      %p32 = scmp.ne.s32.totalorder %s24, %s27
      %p33 = scmp.eq.s32.totalorder %s14, 0
      %p34 = por %p32, %p33
      %p35 = scmp.ne.s32.totalorder %s24, %s27
      %p36 = scmp.eq.s32.totalorder %s19, 1
      %p37 = por %p35, %p36
      %p38 = scmp.ne.s32.totalorder %s27, %s28
      %p39 = scmp.eq.s32.totalorder %s19, 0
      %p40 = por %p38, %p39
      %p41 = scmp.ne.s32.totalorder %s27, %s28
      %p42 = scmp.eq.s32.totalorder %s20, 1
      %p43 = por %p41, %p42
      %p45 = scmp.ne.s32.totalorder %s28, %s44
      %p46 = scmp.eq.s32.totalorder %s20, 0
      %p47 = por %p45, %p46
      %s48 = ssub.s32 %s14, %s21
      %p49 = scmp.eq.s32.totalorder %s48, 0
      %s51 = sadd.s32 %s50, 1
      %s52 = scalar_select %p49, %s50, %s51
      %p55 = pneg %p49
      %p56 = scmp.eq.s32.totalorder %s14, 1
      %p57 = por %p55, %p56
      %p58 = scmp.ne.s32.totalorder %s50, %s53
      %p59 = scmp.eq.s32.totalorder %s14, 0
      %p60 = por %p58, %p59
      %p61 = scmp.ne.s32.totalorder %s50, %s53
      %p62 = scmp.eq.s32.totalorder %s19, 1
      %p63 = por %p61, %p62
      %p64 = scmp.ne.s32.totalorder %s53, %s54
      %p65 = scmp.eq.s32.totalorder %s19, 0
      %p66 = por %p64, %p65
      %p67 = scmp.ne.s32.totalorder %s53, %s54
      %p68 = scmp.eq.s32.totalorder %s20, 1
      %p69 = por %p67, %p68
      %p71 = scmp.ne.s32.totalorder %s54, %s70
      %p72 = scmp.eq.s32.totalorder %s20, 0
      %p73 = por %p71, %p72
      %s74 = ssub.s32 %s14, %s21
      %p75 = scmp.eq.s32.totalorder %s74, 0
      %s77 = sadd.s32 %s76, 1
      %s78 = scalar_select %p75, %s76, %s77
      %p81 = pneg %p75
      %p82 = scmp.eq.s32.totalorder %s14, 1
      %p83 = por %p81, %p82
      %p84 = scmp.ne.s32.totalorder %s76, %s79
      %p85 = scmp.eq.s32.totalorder %s14, 0
      %p86 = por %p84, %p85
      %p87 = scmp.ne.s32.totalorder %s76, %s79
      %p88 = scmp.eq.s32.totalorder %s19, 1
      %p89 = por %p87, %p88
      %p90 = scmp.ne.s32.totalorder %s79, %s80
      %p91 = scmp.eq.s32.totalorder %s19, 0
      %p92 = por %p90, %p91
      %p93 = scmp.ne.s32.totalorder %s79, %s80
      %p94 = scmp.eq.s32.totalorder %s20, 1
      %p95 = por %p93, %p94
      %p97 = scmp.ne.s32.totalorder %s80, %s96
      %p98 = scmp.eq.s32.totalorder %s20, 0
      %p99 = por %p97, %p98
      %p100 = scmp.le.s32.totalorder 1, %s14
      %p101 = scmp.lt.s32.totalorder %s14, 3
      %p102 = pnand %p100, %p101
      %p103 = pneg %p102
      // Predicated region
      $region9: #{tpu_custom_call.1} parent=5 // pred_check
        _
      $region10: #{tpu_custom_call.1} parent=5 // pred_check_branch
        %105 = sbr.rel (%p102) target = $region12
      $region11: #{tpu_custom_call.1} parent=5 // pred_region
        %s106 = ssub.s32 %s14, 1
      $region12: #{tpu_custom_call.1} parent=5 // pred_fallthru
        _
      %p107 = scmp.lt.s32.totalorder %s14, 2
      // Predicated region
      $region13: #{tpu_custom_call.1} parent=5 // pred_check
        %p108 = pneg %p107
      $region14: #{tpu_custom_call.1} parent=5 // pred_check_branch
        %110 = sbr.rel (%p108) target = $region16
      $region15: #{tpu_custom_call.1} parent=5 // pred_region
        // Predicated region
        $region17: #{tpu_custom_call.1} parent=15 // pred_check
          %p111 = pneg %p34
        $region18: #{tpu_custom_call.1} parent=15 // pred_check_branch
          %113 = sbr.rel (%p111) target = $region20
        $region19: #{tpu_custom_call.1} parent=15 // pred_region
          %s114 = sand.u32 %s24, 1
          %s115 = scalar_lea.sflag [#allocation3], %s114
          %s116 = sand.u32 %s24, 1
          %s117 = smul.addr %s116, 8
          %s118 = scalar_lea.vmem [#allocation2], %s117
          %s119 = smul.u32 2, %s14
          %121 = vsyncadd %s115, 0
          %s122 = smul.addr %s119, 4
          %s123 = scalar_lea.hbm %s0, %s122
          %s125 = sshll.u32 %s123, 4
          %s126 = int_to_ptr.hbm [resolvable:$true] %s125
          %s127 = sshll.u32 %s118, 4
          %s128 = int_to_ptr.vmem [resolvable:$true] %s127
          %130 = dma.hbm_to_vmem [thread:$0]  %s126, 128, %s128, %s115
        $region20: #{tpu_custom_call.1} parent=15 // pred_fallthru
          _
        // Predicated region
        $region21: #{tpu_custom_call.1} parent=15 // pred_check
          %p131 = pneg %p60
        $region22: #{tpu_custom_call.1} parent=15 // pred_check_branch
          %133 = sbr.rel (%p131) target = $region24
        $region23: #{tpu_custom_call.1} parent=15 // pred_region
          %s134 = sand.u32 %s50, 1
          %s135 = scalar_lea.sflag [#allocation5], %s134
          %s136 = sand.u32 %s50, 1
          %s137 = smul.addr %s136, 2
          %s138 = scalar_lea.vmem [#allocation4], %s137
          %s139 = smul.u32 2, %s14
          %141 = vsyncadd %s135, 0
          %s142 = scalar_lea.hbm %s1, %s139
          %s144 = sshll.u32 %s142, 4
          %s145 = int_to_ptr.hbm [resolvable:$true] %s144
          %s146 = sshll.u32 %s138, 4
          %s147 = int_to_ptr.vmem [resolvable:$true] %s146
          %149 = dma.hbm_to_vmem [thread:$0]  %s145, 32, %s147, %s135
        $region24: #{tpu_custom_call.1} parent=15 // pred_fallthru
          _
      $region16: #{tpu_custom_call.1} parent=5 // pred_fallthru
        _
      %p150 = scmp.le.s32.totalorder 1, %s14
      %p151 = scmp.lt.s32.totalorder %s14, 3
      %p152 = pnand %p150, %p151
      %p153 = pneg %p152
      // Predicated region
      $region25: #{tpu_custom_call.1} parent=5 // pred_check
        _
      $region26: #{tpu_custom_call.1} parent=5 // pred_check_branch
        %155 = sbr.rel (%p152) target = $region28
      $region27: #{tpu_custom_call.1} parent=5 // pred_region
        %s156 = ssub.s32 %s14, 1
        %s157 = sand.u32 %s27, 1
        %s158 = scalar_lea.sflag [#allocation3], %s157
        %s159 = sand.u32 %s27, 1
        %s160 = smul.addr %s159, 8
        %s161 = scalar_lea.vmem [#allocation2], %s160
        // Predicated region
        $region29: #{tpu_custom_call.1} parent=27 // pred_check
          %p162 = pneg %p40
        $region30: #{tpu_custom_call.1} parent=27 // pred_check_branch
          %164 = sbr.rel (%p162) target = $region32
        $region31: #{tpu_custom_call.1} parent=27 // pred_region
          %166 = dma.done %s158, 128
        $region32: #{tpu_custom_call.1} parent=27 // pred_fallthru
          _
        %s167 = sand.u32 %s53, 1
        %s168 = scalar_lea.sflag [#allocation5], %s167
        %s169 = sand.u32 %s53, 1
        %s170 = smul.addr %s169, 2
        %s171 = scalar_lea.vmem [#allocation4], %s170
        // Predicated region
        $region33: #{tpu_custom_call.1} parent=27 // pred_check
          %p172 = pneg %p66
        $region34: #{tpu_custom_call.1} parent=27 // pred_check_branch
          %174 = sbr.rel (%p172) target = $region36
        $region35: #{tpu_custom_call.1} parent=27 // pred_region
          %176 = dma.done %s168, 32
        $region36: #{tpu_custom_call.1} parent=27 // pred_fallthru
          _
        %s177 = sand.u32 %s27, 1
        %s178 = scalar_lea.sflag [#allocation3], %s177
        %s179 = sand.u32 %s27, 1
        %s180 = smul.addr %s179, 8
        %s181 = scalar_lea.vmem [#allocation2], %s180
        %p182 = pneg %p40
        %p183 = pneg %p37
        %s184 = sand.u32 %s53, 1
        %s185 = scalar_lea.sflag [#allocation5], %s184
        %s186 = sand.u32 %s53, 1
        %s187 = smul.addr %s186, 2
        %s188 = scalar_lea.vmem [#allocation4], %s187
        %p189 = pneg %p66
        %p190 = pneg %p63
        %p191 = pneg %p92
        %p192 = pneg %p89
        %p193 = scmp.lt.s32.totalorder %s19, 1
        %s194 = scalar_select %p193, %s19, 1
        %s195 = scalar_lea.vmem %s2, %s194
        %s196 = smul.u32 2, %s19
        %s197 = smul.u32 2, %s19
        %p198 = scmp.lt.s32.totalorder %s19, 1
        %s199 = scalar_select %p198, %s19, 1
        %s200 = scalar_lea.vmem %s2, %s199
        %v201 = vld [vmem:[%s161] sm:$0xff]
        %v202 = vld [vmem:[%s171] sm:$0x3]
        %204 = vst [vmem:[#allocation1] ss:$2 sm:$0xff] %v201
        %v205 = vld.sshfl [vmem:[#allocation1] sm:$0xff pattern:$0x75316420]
        %v206 = vld.sshfl [vmem:[#allocation1 + $0x8] sm:$0xff pattern:$0x75316420]
        %vm209 = vcmask 1043456
        %v210 = vsel %vm209, %v205, -inf
        %v211 = vrot.slane %v210, 4
        %v212 = vmax.f32 %v210, %v211
        %v213 = vrot.slane %v212, 2
        %v214 = vmax.f32 %v212, %v213
        %v215 = vrot.slane %v214, 1
        %v216 = vmax.f32 %v214, %v215
        %v217 = vsel %vm209, %v206, -inf
        %v218 = vrot.slane %v217, 4
        %v219 = vmax.f32 %v217, %v218
        %v220 = vrot.slane %v219, 2
        %v221 = vmax.f32 %v219, %v220
        %v222 = vrot.slane %v221, 1
        %v223 = vmax.f32 %v221, %v222
        %v226 = vrot.slane %v223, 4
        %v227 = vsel %vm209, %v216, %v226
        %v229 = vsub.f32 %v201, %v227
        %v230 = vmul.f32 %v229, 1.442695
        %v231 = vpow.pop %v230
        %233 = vst [vmem:[#allocation1] ss:$2 sm:$0xff] %v231
        %v234 = vld.sshfl [vmem:[#allocation1] sm:$0xff pattern:$0x75316420]
        %v235 = vld.sshfl [vmem:[#allocation1 + $0x8] sm:$0xff pattern:$0x75316420]
        %v238 = vsel %vm209, %v234, 0.0
        %v239 = vrot.slane %v238, 4
        %v240 = vadd.f32 %v238, %v239
        %v241 = vrot.slane %v240, 2
        %v242 = vadd.f32 %v240, %v241
        %v243 = vrot.slane %v242, 1
        %v244 = vadd.f32 %v242, %v243
        %v245 = vsel %vm209, %v235, 0.0
        %v246 = vrot.slane %v245, 4
        %v247 = vadd.f32 %v245, %v246
        %v248 = vrot.slane %v247, 2
        %v249 = vadd.f32 %v247, %v248
        %v250 = vrot.slane %v249, 1
        %v251 = vadd.f32 %v249, %v250
        %v252 = vlaneseq
        %v253 = vshrl.u32 %v252, 7
        %v254 = vperm.slane %v202, 0
        %v255 = vperm.slane %v202, 1
        %vm256 = vcmp.ne.s32.totalorder %v253, %v254
        %vm257 = vcmp.ne.s32.totalorder %v253, %v255
        %258 = vst [vmem:[#allocation1] ss:$2 sm:$0xff] %v231
        %v259 = vld.sshfl [vmem:[#allocation1] sm:$0xff pattern:$0x75316420]
        %v260 = vld.sshfl [vmem:[#allocation1 + $0x8] sm:$0xff pattern:$0x75316420]
        %v263 = vsel %vm256, %v259, 0.0
        %v264 = vsel %vm257, %v260, 0.0
        %v265 = vsel %vm209, %v263, 0.0
        %v266 = vrot.slane %v265, 4
        %v267 = vadd.f32 %v265, %v266
        %v268 = vrot.slane %v267, 2
        %v269 = vadd.f32 %v267, %v268
        %v270 = vrot.slane %v269, 1
        %v271 = vadd.f32 %v269, %v270
        %v272 = vsel %vm209, %v264, 0.0
        %v273 = vrot.slane %v272, 4
        %v274 = vadd.f32 %v272, %v273
        %v275 = vrot.slane %v274, 2
        %v276 = vadd.f32 %v274, %v275
        %v277 = vrot.slane %v276, 1
        %v278 = vadd.f32 %v276, %v277
        %v279 = vrcp.pop %v244
        %v280 = vmul.f32 %v244, %v279
        %v281 = vsub.f32 1.0, %v280
        %v282 = vmul.f32 %v279, %v281
        %v283 = vadd.f32 %v279, %v282
        %vm284 = vweird.f32 %v244
        %vm285 = vweird.f32 %v279
        %vm286 = vmor %vm284, %vm285
        %v287 = vsel %vm286, %v279, %v283
        %v288 = vand.u32 2147483647, %v244
        %vm289 = vcmp.eq.f32.partialorder %v288, 8.507059e+37
        %v290 = vand.u32 %v244, 2147483648
        %v291 = vor.u32 1.1754944e-38, %v290
        %v292 = vsel %vm289, %v291, %v287
        %v293 = vmul.f32 %v271, %v292
        %v294 = vrcp.pop %v251
        %v295 = vmul.f32 %v251, %v294
        %v296 = vsub.f32 1.0, %v295
        %v297 = vmul.f32 %v294, %v296
        %v298 = vadd.f32 %v294, %v297
        %vm299 = vweird.f32 %v251
        %vm300 = vweird.f32 %v294
        %vm301 = vmor %vm299, %vm300
        %v302 = vsel %vm301, %v294, %v298
        %v303 = vand.u32 2147483647, %v251
        %vm304 = vcmp.eq.f32.partialorder %v303, 8.507059e+37
        %v305 = vand.u32 %v251, 2147483648
        %v306 = vor.u32 1.1754944e-38, %v305
        %v307 = vsel %vm304, %v306, %v302
        %v308 = vmul.f32 %v278, %v307
        %v309 = vlog2.pop %v293
        %v310 = vmul.f32 %v309, 0.6931472
        %v311 = vlog2.pop %v308
        %v312 = vmul.f32 %v311, 0.6931472
        %s313 = smul.u32 %s19, 256
        %v314 = vlaneseq
        %v315 = vand.u32 %v314, 127
        %v316 = vadd.s32 %v315, 128
        %v317 = vstv %s313
        %v318 = vadd.s32 %v317, %v315
        %v319 = vadd.s32 %v317, %v316
        %vm320 = vcmp.lt.s32.totalorder %v318, 512
        %vm321 = vcmp.lt.s32.totalorder %v319, 512
        %v322 = vsel %vm320, %v310, 0.0
        %v323 = vsel %vm321, %v312, 0.0
        %vm324 = vcmask 1040384
        %v325 = vsel %vm324, %v322, 0.0
        %v326 = vsel %vm324, %v323, 0.0
        %v327 = vadd.f32 %v325, %v326
        %328 = vadd.xlane.f32.xlu0 %v327
        %v329 = vpop.xlane.xlu0 %328
        %v330 = vrot.slane %v329, 4
        %v331 = vadd.f32 %v329, %v330
        %v332 = vrot.slane %v331, 2
        %v333 = vadd.f32 %v331, %v332
        %v334 = vrot.slane %v333, 1
        %v335 = vadd.f32 %v333, %v334
        %s336 = vtos %v335
        %v337 = vstv %s336
        %vm338 = vcmask 0
        %339 = vst.msk [vmem:[%s200] sm:$0x1] %vm338, %v337
        %p340 = scmp.lt.s32.totalorder %s19, 1
        %s341 = scalar_select %p340, %s19, 1
        %s342 = scalar_lea.vmem %s2, %s341
        // Predicated region
        $region37: #{tpu_custom_call.1} parent=27 // pred_check
          %p343 = pneg %p89
        $region38: #{tpu_custom_call.1} parent=27 // pred_check_branch
          %345 = sbr.rel (%p343) target = $region40
        $region39: #{tpu_custom_call.1} parent=27 // pred_region
          _
        $region40: #{tpu_custom_call.1} parent=27 // pred_fallthru
          _
      $region28: #{tpu_custom_call.1} parent=5 // pred_fallthru
        _
      %p346 = scmp.le.s32.totalorder 2, %s14
      // Predicated region
      $region41: #{tpu_custom_call.1} parent=5 // pred_check
        %p347 = pneg %p346
      $region42: #{tpu_custom_call.1} parent=5 // pred_check_branch
        %349 = sbr.rel (%p347) target = $region44
      $region43: #{tpu_custom_call.1} parent=5 // pred_region
        %s350 = ssub.s32 %s14, 2
        // Predicated region
        $region45: #{tpu_custom_call.1} parent=43 // pred_check
          %p351 = pneg %p95
        $region46: #{tpu_custom_call.1} parent=43 // pred_check_branch
          %353 = sbr.rel (%p351) target = $region48
        $region47: #{tpu_custom_call.1} parent=43 // pred_region
          %p354 = scmp.lt.s32.totalorder %s20, 1
          %s355 = scalar_select %p354, %s20, 1
          %s356 = scalar_lea.vmem %s2, %s355
        $region48: #{tpu_custom_call.1} parent=43 // pred_fallthru
          _
      $region44: #{tpu_custom_call.1} parent=5 // pred_fallthru
        _
    $region6: #{tpu_custom_call.1} parent=1 // loop_footer
      %s18 = sadd.s32 1, %s14
    $region7: #{tpu_custom_call.1} parent=1 // loop_footer_branch
      %13 = sbr.rel target = $region3
    $region8: #{tpu_custom_call.1} parent=1 // loop_exit
      _
    %357 = vsyncpa [#allocation3], 1
    %s358 = scalar_lea.sflag [#allocation3], 1
    %359 = vsyncpa %s358, 1
    %360 = vsyncpa [#allocation5], 1
    %s361 = scalar_lea.sflag [#allocation5], 1
    %362 = vsyncpa %s361, 1

</llo_original>
